<compile_context>
chip_gen: v6e
topology: v6e:2x2x1
jax: 0.10.0
libtpu: 0.0.40
codegen_flags: <defaults>
</compile_context>

<pallas_src>
import jax
import jax.numpy as jnp
from jax import lax
from jax.experimental import pallas as pl
from jax.experimental.pallas import tpu as pltpu

# Problem sizes (small, consistent with a mel-spectrogram vocoder input).
B = 2        # batch
C_MEL = 32   # mel channels (Conv1d in_channels)
T = 16       # time frames
H = 64       # hidden channels
K = 3        # conv kernel width
PAD = 1      # padding of each conv
BT = B * T


def vocoder_kernel(x_ref, w1_ref, b1_ref, w2_ref, b2_ref, o_ref):
    # x_ref : (B, C_MEL, T)   NCW input, no host transpose / pad
    # w1_ref: (H, K*C_MEL)    conv1 weight, im2col layout w1cat[j, k*C + c] = w1[k, c, j]
    # b1_ref: (H, 1)          conv1 bias (column, broadcasts over time lanes)
    # w2_ref: (K, H, 1)       conv2 weight (per-tap columns)
    # b2_ref: (1, 1)          conv2 bias, SMEM scalar
    # o_ref : (B, 1, T)       NCW output, time on lanes

    # Fold the batch onto the lane (time) axis: x2[c, b*T + t] = x[b, c, t].
    x2 = jnp.concatenate([x_ref[b] for b in range(B)], axis=1)          # (C, B*T)

    # Batch-aware time-shift matrices (built once from iota, one vreg each).
    # They encode BOTH the conv zero-padding and the batch-boundary masking,
    # and the +-1 taps become tiny MXU matmuls (no rolls, no lane slicing).
    row = lax.broadcasted_iota(jnp.int32, (BT, BT), 0)
    col = lax.broadcasted_iota(jnp.int32, (BT, BT), 1)
    tpos = col % T
    s_lft = ((row == col - 1) & (tpos != 0)).astype(jnp.float32)        # picks x[t-1]
    s_rgt = ((row == col + 1) & (tpos != T - 1)).astype(jnp.float32)    # picks x[t+1]

    x_lft = jnp.dot(x2, s_lft, preferred_element_type=jnp.float32)      # (C, B*T)
    x_rgt = jnp.dot(x2, s_rgt, preferred_element_type=jnp.float32)      # (C, B*T)

    # Conv1: im2col-fused — one (H, 3C) x (3C, B*T) MXU matmul for all K taps.
    xcat = jnp.concatenate([x_lft, x2, x_rgt], axis=0)                  # (3C, B*T)
    h = jnp.dot(w1_ref[...], xcat, preferred_element_type=jnp.float32)  # (H, B*T)
    h = h + b1_ref[...]
    h = jnp.where(h > 0, h, 0.1 * h)                                    # LeakyReLU(0.1)

    # Conv2 (H -> 1): taps via the same shift matrices, then VPU broadcast-mul
    # per tap + one sublane reduction over H (kept off the MXU).
    h_lft = jnp.dot(h, s_lft, preferred_element_type=jnp.float32)       # h[t-1]
    h_rgt = jnp.dot(h, s_rgt, preferred_element_type=jnp.float32)       # h[t+1]
    acc = h_lft * w2_ref[0] + h * w2_ref[1] + h_rgt * w2_ref[2]         # (H, B*T)
    o = jnp.tanh(jnp.sum(acc, axis=0, keepdims=True) + b2_ref[0, 0])    # (1, B*T)

    # Lane-dense NCW store: o_ref[b, 0, t] = o[0, b*T + t].
    for b in range(B):
        o_ref[b, :, :] = o[:, b * T:(b + 1) * T]


@jax.jit
def vocoder_forward(x_nct, w1, b1, w2, b2):
    """x_nct: [B, C_MEL, T] (PyTorch NCW). Returns [B, 1, T] (NCW)."""
    # `x.cpu()` in the wrapper is a device transfer: numerically the identity.
    # One-time parameter re-layout (cold path, not per-sample work):
    w1cat = jnp.transpose(w1, (2, 0, 1)).reshape(H, K * C_MEL)   # (H, K*C)
    b1col = jnp.reshape(b1, (H, 1))                              # (H, 1)

    return pl.pallas_call(
        vocoder_kernel,
        out_shape=jax.ShapeDtypeStruct((B, 1, T), jnp.float32),
        in_specs=[
            pl.BlockSpec(memory_space=pltpu.MemorySpace.VMEM),   # x   (B, C, T)
            pl.BlockSpec(memory_space=pltpu.MemorySpace.VMEM),   # w1cat (H, K*C)
            pl.BlockSpec(memory_space=pltpu.MemorySpace.VMEM),   # b1  (H, 1)
            pl.BlockSpec(memory_space=pltpu.MemorySpace.VMEM),   # w2  (K, H, 1)
            pl.BlockSpec(memory_space=pltpu.MemorySpace.SMEM),   # b2  (1, 1) scalar
        ],
        out_specs=pl.BlockSpec(memory_space=pltpu.MemorySpace.VMEM),
    )(x_nct, w1cat, b1col, w2, b2)


def ref_forward(x_nct, w1, b1, w2, b2):
    """Pure-JAX reference (same semantics as the fused kernel)."""
    x = jnp.transpose(x_nct, (0, 2, 1))
    xp = jnp.pad(x, ((0, 0), (PAD, PAD), (0, 0)))
    h = sum(jnp.einsum('btc,ch->bth', xp[:, k:k + T, :], w1[k]) for k in range(K))
    h = h + b1[0]
    h = jnp.where(h > 0, h, 0.1 * h)
    hp = jnp.pad(h, ((0, 0), (PAD, PAD), (0, 0)))
    o = sum(jnp.einsum('bth,ho->bto', hp[:, k:k + T, :], w2[k]) for k in range(K))
    o = jnp.tanh(o + b2[0])
    return jnp.transpose(o, (0, 2, 1))


if __name__ == "__main__":
    key = jax.random.PRNGKey(0)
    kx, k1, k2, k3, k4 = jax.random.split(key, 5)

    # Deterministic synthetic parameters (shapes dictated by the vocoder above).
    x = jax.random.normal(kx, (B, C_MEL, T), jnp.float32)
    w1 = jax.random.normal(k1, (K, C_MEL, H), jnp.float32) * 0.1
    b1 = jax.random.normal(k2, (1, H), jnp.float32) * 0.1
    w2 = jax.random.normal(k3, (K, H, 1), jnp.float32) * 0.1
    b2 = jax.random.normal(k4, (1, 1), jnp.float32) * 0.1

    out = jax.block_until_ready(vocoder_forward(x, w1, b1, w2, b2))
    ref = ref_forward(x, w1, b1, w2, b2)

    assert out.shape == (B, 1, T), out.shape
    assert jnp.allclose(out, ref, atol=1e-5, rtol=1e-5), \
        float(jnp.max(jnp.abs(out - ref)))
    print("KERNEL_OK")
</pallas_src>

<mosaic_0001>
module attributes {stable_mosaic.version = 11 : i64} {
  func.func @vocoder_kernel(%arg0: memref<2x32x16xf32, #tpu.memory_space<vmem>>, %arg1: memref<64x96xf32, #tpu.memory_space<vmem>>, %arg2: memref<64x1xf32, #tpu.memory_space<vmem>>, %arg3: memref<3x64x1xf32, #tpu.memory_space<vmem>>, %arg4: memref<1x1xf32, #tpu.memory_space<smem>>, %arg5: memref<2x1x16xf32, #tpu.memory_space<vmem>>) attributes {dimension_semantics = [], scalar_prefetch = 0 : i64, scratch_operands = 0 : i64, tpu.core_type = #tpu.core_type<tc>} {
    %c0 = arith.constant 0 : index
    %c0_0 = arith.constant 0 : index
    %c0_1 = arith.constant 0 : index
    %0 = vector.load %arg0[%c0, %c0_0, %c0_1] : memref<2x32x16xf32, #tpu.memory_space<vmem>>, vector<1x32x16xf32>
    %1 = vector.shape_cast %0 : vector<1x32x16xf32> to vector<32x16xf32>
    %c1 = arith.constant 1 : index
    %c0_2 = arith.constant 0 : index
    %c0_3 = arith.constant 0 : index
    %2 = vector.load %arg0[%c1, %c0_2, %c0_3] : memref<2x32x16xf32, #tpu.memory_space<vmem>>, vector<1x32x16xf32>
    %3 = vector.shape_cast %2 : vector<1x32x16xf32> to vector<32x16xf32>
    %4 = tpu.concatenate %1, %3 in 1 : vector<32x16xf32>, vector<32x16xf32> -> vector<32x32xf32>
    %5 = tpu.iota {dimensions = array<i32: 0>} : vector<32x32xi32>
    %6 = tpu.iota {dimensions = array<i32: 1>} : vector<32x32xi32>
    %c16_i32 = arith.constant 16 : i32
    %c0_i32 = arith.constant 0 : i32
    %7 = arith.cmpi eq, %c16_i32, %c0_i32 : i32
    %c1_i32 = arith.constant 1 : i32
    %8 = arith.select %7, %c1_i32, %c16_i32 : i32
    %9 = vector.broadcast %8 : i32 to vector<32x32xi32>
    %10 = arith.remsi %6, %9 : vector<32x32xi32>
    %c0_i32_4 = arith.constant 0 : i32
    %11 = vector.broadcast %c0_i32_4 : i32 to vector<32x32xi32>
    %12 = arith.cmpi ne, %10, %11 : vector<32x32xi32>
    %c0_i32_5 = arith.constant 0 : i32
    %13 = vector.broadcast %c0_i32_5 : i32 to vector<32x32xi32>
    %14 = arith.cmpi slt, %10, %13 : vector<32x32xi32>
    %c0_i32_6 = arith.constant 0 : i32
    %15 = arith.cmpi slt, %8, %c0_i32_6 : i32
    %16 = vector.broadcast %15 : i1 to vector<32x32xi1>
    %17 = vector.broadcast %16 : vector<32x32xi1> to vector<32x32xi1>
    %18 = arith.xori %14, %17 : vector<32x32xi1>
    %19 = arith.andi %18, %12 : vector<32x32xi1>
    %20 = vector.broadcast %8 : i32 to vector<32x32xi32>
    %21 = arith.addi %10, %20 : vector<32x32xi32>
    %22 = arith.select %19, %21, %10 : vector<32x32xi1>, vector<32x32xi32>
    %c1_i32_7 = arith.constant 1 : i32
    %23 = vector.broadcast %c1_i32_7 : i32 to vector<32x32xi32>
    %24 = arith.subi %6, %23 : vector<32x32xi32>
    %25 = arith.cmpi eq, %5, %24 : vector<32x32xi32>
    %c0_i32_8 = arith.constant 0 : i32
    %26 = vector.broadcast %c0_i32_8 : i32 to vector<32x32xi32>
    %27 = arith.cmpi ne, %22, %26 : vector<32x32xi32>
    %28 = arith.andi %25, %27 : vector<32x32xi1>
    %29 = arith.extui %28 : vector<32x32xi1> to vector<32x32xi32>
    %30 = arith.sitofp %29 : vector<32x32xi32> to vector<32x32xf32>
    %c1_i32_9 = arith.constant 1 : i32
    %31 = vector.broadcast %c1_i32_9 : i32 to vector<32x32xi32>
    %32 = arith.addi %6, %31 : vector<32x32xi32>
    %33 = arith.cmpi eq, %5, %32 : vector<32x32xi32>
    %c15_i32 = arith.constant 15 : i32
    %34 = vector.broadcast %c15_i32 : i32 to vector<32x32xi32>
    %35 = arith.cmpi ne, %22, %34 : vector<32x32xi32>
    %36 = arith.andi %33, %35 : vector<32x32xi1>
    %37 = arith.extui %36 : vector<32x32xi1> to vector<32x32xi32>
    %38 = arith.sitofp %37 : vector<32x32xi32> to vector<32x32xf32>
    %cst = arith.constant dense<0.000000e+00> : vector<32x32xf32>
    %39 = tpu.matmul %4, %30, %cst {dimension_numbers = #tpu.dot_dimension_numbers<[1], [0], [0], [1], [0, 0, 1, 1], [], []>} : vector<32x32xf32>, vector<32x32xf32>, vector<32x32xf32> -> vector<32x32xf32>
    %cst_10 = arith.constant dense<0.000000e+00> : vector<32x32xf32>
    %40 = tpu.matmul %4, %38, %cst_10 {dimension_numbers = #tpu.dot_dimension_numbers<[1], [0], [0], [1], [0, 0, 1, 1], [], []>} : vector<32x32xf32>, vector<32x32xf32>, vector<32x32xf32> -> vector<32x32xf32>
    %41 = tpu.concatenate %39, %4, %40 in 0 : vector<32x32xf32>, vector<32x32xf32>, vector<32x32xf32> -> vector<96x32xf32>
    %c0_11 = arith.constant 0 : index
    %c0_12 = arith.constant 0 : index
    %42 = vector.load %arg1[%c0_11, %c0_12] : memref<64x96xf32, #tpu.memory_space<vmem>>, vector<64x96xf32>
    %cst_13 = arith.constant dense<0.000000e+00> : vector<64x32xf32>
    %43 = tpu.matmul %42, %41, %cst_13 {dimension_numbers = #tpu.dot_dimension_numbers<[1], [0], [0], [1], [0, 0, 1, 1], [], []>} : vector<64x96xf32>, vector<96x32xf32>, vector<64x32xf32> -> vector<64x32xf32>
    %c0_14 = arith.constant 0 : index
    %c0_15 = arith.constant 0 : index
    %44 = vector.load %arg2[%c0_14, %c0_15] : memref<64x1xf32, #tpu.memory_space<vmem>>, vector<64x1xf32>
    %45 = vector.broadcast %44 : vector<64x1xf32> to vector<64x32xf32>
    %46 = arith.addf %43, %45 : vector<64x32xf32>
    %cst_16 = arith.constant 0.000000e+00 : f32
    %47 = vector.broadcast %cst_16 : f32 to vector<64x32xf32>
    %48 = arith.cmpf ogt, %46, %47 : vector<64x32xf32>
    %cst_17 = arith.constant 1.000000e-01 : f32
    %49 = vector.broadcast %cst_17 : f32 to vector<64x32xf32>
    %50 = arith.mulf %49, %46 : vector<64x32xf32>
    %51 = arith.select %48, %46, %50 : vector<64x32xi1>, vector<64x32xf32>
    %cst_18 = arith.constant dense<0.000000e+00> : vector<64x32xf32>
    %52 = tpu.matmul %51, %30, %cst_18 {dimension_numbers = #tpu.dot_dimension_numbers<[1], [0], [0], [1], [0, 0, 1, 1], [], []>} : vector<64x32xf32>, vector<32x32xf32>, vector<64x32xf32> -> vector<64x32xf32>
    %cst_19 = arith.constant dense<0.000000e+00> : vector<64x32xf32>
    %53 = tpu.matmul %51, %38, %cst_19 {dimension_numbers = #tpu.dot_dimension_numbers<[1], [0], [0], [1], [0, 0, 1, 1], [], []>} : vector<64x32xf32>, vector<32x32xf32>, vector<64x32xf32> -> vector<64x32xf32>
    %c0_20 = arith.constant 0 : index
    %c0_21 = arith.constant 0 : index
    %c0_22 = arith.constant 0 : index
    %54 = vector.load %arg3[%c0_20, %c0_21, %c0_22] : memref<3x64x1xf32, #tpu.memory_space<vmem>>, vector<1x64x1xf32>
    %55 = vector.shape_cast %54 : vector<1x64x1xf32> to vector<64x1xf32>
    %56 = vector.broadcast %55 : vector<64x1xf32> to vector<64x32xf32>
    %57 = arith.mulf %52, %56 : vector<64x32xf32>
    %c1_23 = arith.constant 1 : index
    %c0_24 = arith.constant 0 : index
    %c0_25 = arith.constant 0 : index
    %58 = vector.load %arg3[%c1_23, %c0_24, %c0_25] : memref<3x64x1xf32, #tpu.memory_space<vmem>>, vector<1x64x1xf32>
    %59 = vector.shape_cast %58 : vector<1x64x1xf32> to vector<64x1xf32>
    %60 = vector.broadcast %59 : vector<64x1xf32> to vector<64x32xf32>
    %61 = arith.mulf %51, %60 : vector<64x32xf32>
    %62 = arith.addf %57, %61 : vector<64x32xf32>
    %c2 = arith.constant 2 : index
    %c0_26 = arith.constant 0 : index
    %c0_27 = arith.constant 0 : index
    %63 = vector.load %arg3[%c2, %c0_26, %c0_27] : memref<3x64x1xf32, #tpu.memory_space<vmem>>, vector<1x64x1xf32>
    %64 = vector.shape_cast %63 : vector<1x64x1xf32> to vector<64x1xf32>
    %65 = vector.broadcast %64 : vector<64x1xf32> to vector<64x32xf32>
    %66 = arith.mulf %53, %65 : vector<64x32xf32>
    %67 = arith.addf %62, %66 : vector<64x32xf32>
    %cst_28 = arith.constant dense<0.000000e+00> : vector<32xf32>
    %68 = vector.multi_reduction <add>, %67, %cst_28 [0] : vector<64x32xf32> to vector<32xf32>
    %69 = vector.shape_cast %68 : vector<32xf32> to vector<1x32xf32>
    %c0_29 = arith.constant 0 : index
    %c0_30 = arith.constant 0 : index
    %70 = memref.load %arg4[%c0_29, %c0_30] : memref<1x1xf32, #tpu.memory_space<smem>>
    %71 = vector.broadcast %70 : f32 to vector<1x32xf32>
    %72 = arith.addf %69, %71 : vector<1x32xf32>
    %73 = math.tanh %72 : vector<1x32xf32>
    %74 = vector.extract_strided_slice %73 {offsets = [0, 0], sizes = [1, 16], strides = [1, 1]} : vector<1x32xf32> to vector<1x16xf32>
    %c0_31 = arith.constant 0 : index
    %c0_32 = arith.constant 0 : index
    %c0_33 = arith.constant 0 : index
    %75 = vector.load %arg5[%c0_31, %c0_32, %c0_33] : memref<2x1x16xf32, #tpu.memory_space<vmem>>, vector<1x1x16xf32>
    %76 = vector.shape_cast %75 : vector<1x1x16xf32> to vector<1x16xf32>
    %77 = vector.shape_cast %74 : vector<1x16xf32> to vector<1x1x16xf32>
    tpu.vector_store %arg5[%c0_31, %c0_32, %c0_33], %77 {strides = array<i32>} : memref<2x1x16xf32, #tpu.memory_space<vmem>>, vector<1x1x16xf32>,
    %78 = vector.extract_strided_slice %73 {offsets = [0, 16], sizes = [1, 16], strides = [1, 1]} : vector<1x32xf32> to vector<1x16xf32>
    %c1_34 = arith.constant 1 : index
    %c0_35 = arith.constant 0 : index
    %c0_36 = arith.constant 0 : index
    %79 = vector.load %arg5[%c1_34, %c0_35, %c0_36] : memref<2x1x16xf32, #tpu.memory_space<vmem>>, vector<1x1x16xf32>
    %80 = vector.shape_cast %79 : vector<1x1x16xf32> to vector<1x16xf32>
    %81 = vector.shape_cast %78 : vector<1x16xf32> to vector<1x1x16xf32>
    tpu.vector_store %arg5[%c1_34, %c0_35, %c0_36], %81 {strides = array<i32>} : memref<2x1x16xf32, #tpu.memory_space<vmem>>, vector<1x1x16xf32>,
    return
  }
}

</mosaic_0001>

<llo_original>
// kernel: vocoder_forward.1
$region0: #{vocoder_forward.1}
  #allocation0 [shape = 'u32[]', space=smem, size = 0x4, offset = 0x4, fixed_abs, tag = 'smem constant byte address 0x4 - core index']
  #allocation1 [shape = 'u32[144,128]{1,0:T(1,128)}', space=vmem, size = 0x12000, scoped, tag = 'internal scratch']
  #allocation2 [shape = 'f32[1,1]{1,0:T(1,128)S(6)}', space=smem, size = 0x200, scoped, tag = 'scoped memory for vocoder_forward.1']
  %s0 = inlined_call_operand.vmem [shape: f32[2,32,16], index: 0, kind: input, shape index: {}]
  %s1 = inlined_call_operand.vmem [shape: f32[64,96], index: 1, kind: input, shape index: {}]
  %s2 = inlined_call_operand.vmem [shape: f32[64,1], index: 2, kind: input, shape index: {}]
  %s3 = inlined_call_operand.vmem [shape: f32[3,64,1], index: 3, kind: input, shape index: {}]
  %s4 = inlined_call_operand.<no memory space> [shape: f32[1,1], index: 4, kind: input, shape index: {}]
  %s5 = inlined_call_operand.hbm [shape: f32[2,1,16], index: 5, kind: output, shape index: {}]
  %s6 = sld [smem:[#allocation0]]
  $region30: #{vocoder_forward.1} parent=0
    _
  %s8 = ssub.s32 1, %s6
  %s9 = scalar_select 0, %s8, %s6
  %10 = sst [smem:[#allocation2]] %s4
  $region1: #{vocoder_forward.1} parent=0
    #allocation3 [shape = 'u8[1024]{0}', space=vmem, size = 0x400, scoped, tag = 'output window, operand 0, single buffered']
    #allocation4 [shape = 's32[1]{0}', space=sflag, size = 0x4, scoped, tag = 'scoped memory for vocoder_forward.1']
    %11 = vsyncpa [#allocation4], 0
    // Predicated region
    $region2: #{vocoder_forward.1} parent=1 // pred_check
      _
    $region3: #{vocoder_forward.1} parent=1 // pred_check_branch
      %13 = sbr.rel (0) target = $region5
    $region4: #{vocoder_forward.1} parent=1 // pred_region
      _
    $region5: #{vocoder_forward.1} parent=1 // pred_fallthru
      _
    // Predicated region
    $region6: #{vocoder_forward.1} parent=1 // pred_check
      _
    $region7: #{vocoder_forward.1} parent=1 // pred_check_branch
      %15 = sbr.rel (0) target = $region9
    $region8: #{vocoder_forward.1} parent=1 // pred_region
      _
    $region9: #{vocoder_forward.1} parent=1 // pred_fallthru
      _
    // Predicated region
    $region10: #{vocoder_forward.1} parent=1 // pred_check
      _
    $region11: #{vocoder_forward.1} parent=1 // pred_check_branch
      %17 = sbr.rel (0) target = $region13
    $region12: #{vocoder_forward.1} parent=1 // pred_region
      _
    $region13: #{vocoder_forward.1} parent=1 // pred_fallthru
      _
    // Predicated region
    $region14: #{vocoder_forward.1} parent=1 // pred_check
      _
    $region15: #{vocoder_forward.1} parent=1 // pred_check_branch
      %19 = sbr.rel (0) target = $region17
    $region16: #{vocoder_forward.1} parent=1 // pred_region
      _
    $region17: #{vocoder_forward.1} parent=1 // pred_fallthru
      _
    // Predicated region
    $region18: #{vocoder_forward.1} parent=1 // pred_check
      _
    $region19: #{vocoder_forward.1} parent=1 // pred_check_branch
      %21 = sbr.rel (0) target = $region21
    $region20: #{vocoder_forward.1} parent=1 // pred_region
      _
    $region21: #{vocoder_forward.1} parent=1 // pred_fallthru
      _
    %v22 = vld [vmem:[%s0] sm:$0xff]
    %v23 = vld [vmem:[%s0 + $0x8] sm:$0xff]
    %v24 = vld [vmem:[%s0 + $0x10] sm:$0xff]
    %v25 = vld [vmem:[%s0 + $0x18] sm:$0xff]
    %s26 = scalar_lea.vmem %s0, 32
    %v27 = vld [vmem:[%s26] sm:$0xff]
    %v28 = vld [vmem:[%s26 + $0x8] sm:$0xff]
    %v29 = vld [vmem:[%s26 + $0x10] sm:$0xff]
    %v30 = vld [vmem:[%s26 + $0x18] sm:$0xff]
    %35 = vrot.lane.b32.xlu0 %v27, 16
    %v36 = vpop.permute.xlu0 %35
    %37 = vrot.lane.b32.xlu0 %v28, 16
    %v38 = vpop.permute.xlu0 %37
    %39 = vrot.lane.b32.xlu0 %v29, 16
    %v40 = vpop.permute.xlu0 %39
    %41 = vrot.lane.b32.xlu0 %v30, 16
    %v42 = vpop.permute.xlu0 %41
    %vm47 = vcmask 130048
    %v48 = vsel %vm47, %v22, %v36
    %v49 = vsel %vm47, %v23, %v38
    %v50 = vsel %vm47, %v24, %v40
    %v51 = vsel %vm47, %v25, %v42
    %v52 = vlaneseq
    %v53 = vshrl.u32 %v52, 7
    %v54 = vadd.s32 %v53, 8
    %v55 = vadd.s32 %v53, 16
    %v56 = vadd.s32 %v53, 24
    %v57 = vlaneseq
    %v58 = vand.u32 %v57, 127
    %vm59 = vcmp.lt.s32.totalorder %v58, 0
    %v60 = vsub.s32 0, %v58
    %v61 = vsel %vm59, %v60, %v58
    %v62 = vshrl.u32 %v61, 4
    %v63 = vand.u32 %v61, 15
    %v64 = vsub.s32 0, %v63
    %v65 = vsel %vm59, %v64, %v63
    %vm66 = vcmp.ne.s32.totalorder %v65, 0
    %vm67 = vcmp.lt.s32.totalorder %v65, 0
    %vm68 = vmand %vm67, %vm66
    %v69 = vadd.s32 %v65, 16
    %v70 = vsel %vm68, %v69, %v65
    %v71 = vsub.s32 %v58, 1
    %vm72 = vcmp.eq.s32.totalorder %v53, %v71
    %vm73 = vcmp.eq.s32.totalorder %v54, %v71
    %vm74 = vcmp.eq.s32.totalorder %v55, %v71
    %vm75 = vcmp.eq.s32.totalorder %v56, %v71
    %vm76 = vcmp.ne.s32.totalorder %v70, 0
    %vm77 = vmand %vm72, %vm76
    %vm78 = vmand %vm73, %vm76
    %vm79 = vmand %vm74, %vm76
    %vm80 = vmand %vm75, %vm76
    %v81 = vsel %vm77, 1, 0
    %v82 = vsel %vm78, 1, 0
    %v83 = vsel %vm79, 1, 0
    %v84 = vsel %vm80, 1, 0
    %v85 = vcvt.s32.f32 %v81
    %v86 = vcvt.s32.f32 %v82
    %v87 = vcvt.s32.f32 %v83
    %v88 = vcvt.s32.f32 %v84
    %v89 = vadd.s32 %v58, 1
    %vm90 = vcmp.eq.s32.totalorder %v53, %v89
    %vm91 = vcmp.eq.s32.totalorder %v54, %v89
    %vm92 = vcmp.eq.s32.totalorder %v55, %v89
    %vm93 = vcmp.eq.s32.totalorder %v56, %v89
    %vm94 = vcmp.ne.s32.totalorder %v70, 15
    %vm95 = vmand %vm90, %vm94
    %vm96 = vmand %vm91, %vm94
    %vm97 = vmand %vm92, %vm94
    %vm98 = vmand %vm93, %vm94
    %v99 = vsel %vm95, 1, 0
    %v100 = vsel %vm96, 1, 0
    %v101 = vsel %vm97, 1, 0
    %v102 = vsel %vm98, 1, 0
    %v103 = vcvt.s32.f32 %v99
    %v104 = vcvt.s32.f32 %v100
    %v105 = vcvt.s32.f32 %v101
    %v106 = vcvt.s32.f32 %v102
    %vm107 = vcmask 261120
    %v109 = vsel %vm107, %v48, 0
    %v112 = vsel %vm107, %v49, 0
    %v115 = vsel %vm107, %v50, 0
    %v118 = vsel %vm107, %v51, 0
    %120 = vmatprep.subr.mxu0 0.0
    %121 = vmatpush1.msra.mxu0 0.0
    %122 = vmatprep.subr.mxu0 0.0
    %123 = vmatpush1.msra.mxu0 0.0
    %124 = vmatprep.subr.mxu0 0.0
    %125 = vmatpush1.msra.mxu0 0.0
    %126 = vmatprep.subr.mxu0 0.0
    %127 = vmatpush1.msra.mxu0 0.0
    %128 = vmatprep.subr.mxu0 0.0
    %129 = vmatpush1.msra.mxu0 0.0
    %130 = vmatprep.subr.mxu0 0.0
    %131 = vmatpush1.msra.mxu0 0.0
    %132 = vmatprep.subr.mxu0 0.0
    %133 = vmatpush1.msra.mxu0 0.0
    %134 = vmatprep.subr.mxu0 0.0
    %135 = vmatpush1.msra.mxu0 0.0
    %136 = vmatprep.subr.mxu0 0.0
    %137 = vmatpush1.msra.mxu0 0.0
    %138 = vmatprep.subr.mxu0 0.0
    %139 = vmatpush1.msra.mxu0 0.0
    %140 = vmatprep.subr.mxu0 0.0
    %141 = vmatpush1.msra.mxu0 0.0
    %142 = vmatprep.subr.mxu0 0.0
    %143 = vmatpush1.msra.mxu0 0.0
    %144 = vmatprep.subr.mxu0 0.0
    %145 = vmatpush1.msra.mxu0 %v88
    %146 = vmatprep.subr.mxu0 0.0
    %147 = vmatpush1.msra.mxu0 %v87
    %148 = vmatprep.subr.mxu0 0.0
    %149 = vmatpush1.msra.mxu0 %v86
    %150 = vmatprep.subr.mxu0 0.0
    %151 = vmatpush1.msra.mxu0 %v85
    %152 = vmatprep.subr.mxu0 0.0
    %153 = vmatpush2.msra.mxu0 0.0
    %154 = vmatprep.subr.mxu0 0.0
    %155 = vmatpush2.msra.mxu0 0.0
    %156 = vmatprep.subr.mxu0 0.0
    %157 = vmatpush2.msra.mxu0 0.0
    %158 = vmatprep.subr.mxu0 0.0
    %159 = vmatpush2.msra.mxu0 0.0
    %160 = vmatprep.subr.mxu0 0.0
    %161 = vmatpush2.msra.mxu0 0.0
    %162 = vmatprep.subr.mxu0 0.0
    %163 = vmatpush2.msra.mxu0 0.0
    %164 = vmatprep.subr.mxu0 0.0
    %165 = vmatpush2.msra.mxu0 0.0
    %166 = vmatprep.subr.mxu0 0.0
    %167 = vmatpush2.msra.mxu0 0.0
    %168 = vmatprep.subr.mxu0 0.0
    %169 = vmatpush2.msra.mxu0 0.0
    %170 = vmatprep.subr.mxu0 0.0
    %171 = vmatpush2.msra.mxu0 0.0
    %172 = vmatprep.subr.mxu0 0.0
    %173 = vmatpush2.msra.mxu0 0.0
    %174 = vmatprep.subr.mxu0 0.0
    %175 = vmatpush2.msra.mxu0 0.0
    %176 = vmatprep.subr.mxu0 0.0
    %177 = vmatpush2.msra.mxu0 0.0
    %178 = vmatprep.subr.mxu0 0.0
    %179 = vmatpush2.msra.mxu0 0.0
    %180 = vmatprep.subr.mxu0 0.0
    %181 = vmatpush2.msra.mxu0 0.0
    %182 = vmatprep.subr.mxu0 0.0
    %183 = vmatpush2.msra.mxu0 0.0
    %184 = vmatprep.mubr.f32.mxu0 0.0
    %185 = vmatmul.mubr.f32.gmra.mxu0 %v109
    %v186 = vpop.f32.mrf.mxu0
    %v187 = vadd.f32 0.0, %v186
    %v188 = vpop.f32.mrf.mxu0
    %189 = vmatprep.mubr.f32.mxu0 0.0
    %190 = vmatmul.mubr.f32.gmra.mxu0 %v112
    %v191 = vpop.f32.mrf.mxu0
    %v192 = vadd.f32 0.0, %v191
    %v193 = vpop.f32.mrf.mxu0
    %194 = vmatprep.mubr.f32.mxu0 0.0
    %195 = vmatmul.mubr.f32.gmra.mxu0 %v115
    %v196 = vpop.f32.mrf.mxu0
    %v197 = vadd.f32 0.0, %v196
    %v198 = vpop.f32.mrf.mxu0
    %199 = vmatprep.mubr.f32.mxu0 0.0
    %200 = vmatmul.mubr.f32.gmra.mxu0 %v118
    %v201 = vpop.f32.mrf.mxu0
    %v202 = vadd.f32 0.0, %v201
    %v203 = vpop.f32.mrf.mxu0
    %204 = vdwg.mxu0
    %205 = vmatprep.subr.mxu0 0.0
    %206 = vmatpush1.msra.mxu0 0.0
    %207 = vmatprep.subr.mxu0 0.0
    %208 = vmatpush1.msra.mxu0 0.0
    %209 = vmatprep.subr.mxu0 0.0
    %210 = vmatpush1.msra.mxu0 0.0
    %211 = vmatprep.subr.mxu0 0.0
    %212 = vmatpush1.msra.mxu0 0.0
    %213 = vmatprep.subr.mxu0 0.0
    %214 = vmatpush1.msra.mxu0 0.0
    %215 = vmatprep.subr.mxu0 0.0
    %216 = vmatpush1.msra.mxu0 0.0
    %217 = vmatprep.subr.mxu0 0.0
    %218 = vmatpush1.msra.mxu0 0.0
    %219 = vmatprep.subr.mxu0 0.0
    %220 = vmatpush1.msra.mxu0 0.0
    %221 = vmatprep.subr.mxu0 0.0
    %222 = vmatpush1.msra.mxu0 0.0
    %223 = vmatprep.subr.mxu0 0.0
    %224 = vmatpush1.msra.mxu0 0.0
    %225 = vmatprep.subr.mxu0 0.0
    %226 = vmatpush1.msra.mxu0 0.0
    %227 = vmatprep.subr.mxu0 0.0
    %228 = vmatpush1.msra.mxu0 0.0
    %229 = vmatprep.subr.mxu0 0.0
    %230 = vmatpush1.msra.mxu0 %v106
    %231 = vmatprep.subr.mxu0 0.0
    %232 = vmatpush1.msra.mxu0 %v105
    %233 = vmatprep.subr.mxu0 0.0
    %234 = vmatpush1.msra.mxu0 %v104
    %235 = vmatprep.subr.mxu0 0.0
    %236 = vmatpush1.msra.mxu0 %v103
    %237 = vmatprep.subr.mxu0 0.0
    %238 = vmatpush2.msra.mxu0 0.0
    %239 = vmatprep.subr.mxu0 0.0
    %240 = vmatpush2.msra.mxu0 0.0
    %241 = vmatprep.subr.mxu0 0.0
    %242 = vmatpush2.msra.mxu0 0.0
    %243 = vmatprep.subr.mxu0 0.0
    %244 = vmatpush2.msra.mxu0 0.0
    %245 = vmatprep.subr.mxu0 0.0
    %246 = vmatpush2.msra.mxu0 0.0
    %247 = vmatprep.subr.mxu0 0.0
    %248 = vmatpush2.msra.mxu0 0.0
    %249 = vmatprep.subr.mxu0 0.0
    %250 = vmatpush2.msra.mxu0 0.0
    %251 = vmatprep.subr.mxu0 0.0
    %252 = vmatpush2.msra.mxu0 0.0
    %253 = vmatprep.subr.mxu0 0.0
    %254 = vmatpush2.msra.mxu0 0.0
    %255 = vmatprep.subr.mxu0 0.0
    %256 = vmatpush2.msra.mxu0 0.0
    %257 = vmatprep.subr.mxu0 0.0
    %258 = vmatpush2.msra.mxu0 0.0
    %259 = vmatprep.subr.mxu0 0.0
    %260 = vmatpush2.msra.mxu0 0.0
    %261 = vmatprep.subr.mxu0 0.0
    %262 = vmatpush2.msra.mxu0 0.0
    %263 = vmatprep.subr.mxu0 0.0
    %264 = vmatpush2.msra.mxu0 0.0
    %265 = vmatprep.subr.mxu0 0.0
    %266 = vmatpush2.msra.mxu0 0.0
    %267 = vmatprep.subr.mxu0 0.0
    %268 = vmatpush2.msra.mxu0 0.0
    %269 = vmatprep.mubr.f32.mxu0 0.0
    %270 = vmatmul.mubr.f32.gmra.mxu0 %v109
    %v271 = vpop.f32.mrf.mxu0
    %v272 = vadd.f32 0.0, %v271
    %v273 = vpop.f32.mrf.mxu0
    %274 = vmatprep.mubr.f32.mxu0 0.0
    %275 = vmatmul.mubr.f32.gmra.mxu0 %v112
    %v276 = vpop.f32.mrf.mxu0
    %v277 = vadd.f32 0.0, %v276
    %v278 = vpop.f32.mrf.mxu0
    %279 = vmatprep.mubr.f32.mxu0 0.0
    %280 = vmatmul.mubr.f32.gmra.mxu0 %v115
    %v281 = vpop.f32.mrf.mxu0
    %v282 = vadd.f32 0.0, %v281
    %v283 = vpop.f32.mrf.mxu0
    %284 = vmatprep.mubr.f32.mxu0 0.0
    %285 = vmatmul.mubr.f32.gmra.mxu0 %v118
    %v286 = vpop.f32.mrf.mxu0
    %v287 = vadd.f32 0.0, %v286
    %v288 = vpop.f32.mrf.mxu0
    %289 = vdwg.mxu0
    %v290 = vld [vmem:[%s1] sm:$0xff]
    %v291 = vld [vmem:[%s1 + $0x8] sm:$0xff]
    %v292 = vld [vmem:[%s1 + $0x10] sm:$0xff]
    %v293 = vld [vmem:[%s1 + $0x18] sm:$0xff]
    %v294 = vld [vmem:[%s1 + $0x20] sm:$0xff]
    %v295 = vld [vmem:[%s1 + $0x28] sm:$0xff]
    %v296 = vld [vmem:[%s1 + $0x30] sm:$0xff]
    %v297 = vld [vmem:[%s1 + $0x38] sm:$0xff]
    %v298 = vld [vmem:[%s2] sm:$0xff]
    %v299 = vld [vmem:[%s2 + $0x8] sm:$0xff]
    %v300 = vld [vmem:[%s2 + $0x10] sm:$0xff]
    %v301 = vld [vmem:[%s2 + $0x18] sm:$0xff]
    %v302 = vld [vmem:[%s2 + $0x20] sm:$0xff]
    %v303 = vld [vmem:[%s2 + $0x28] sm:$0xff]
    %v304 = vld [vmem:[%s2 + $0x30] sm:$0xff]
    %v305 = vld [vmem:[%s2 + $0x38] sm:$0xff]
    %307 = vset.pattern.permute.xlu0 0
    %308 = vperm.xlu0 %307, %v298
    %v309 = vpop.permute.xlu0 %308
    %312 = vset.pattern.permute.xlu0 0
    %313 = vperm.xlu0 %312, %v299
    %v314 = vpop.permute.xlu0 %313
    %317 = vset.pattern.permute.xlu0 0
    %318 = vperm.xlu0 %317, %v300
    %v319 = vpop.permute.xlu0 %318
    %322 = vset.pattern.permute.xlu0 0
    %323 = vperm.xlu0 %322, %v301
    %v324 = vpop.permute.xlu0 %323
    %327 = vset.pattern.permute.xlu0 0
    %328 = vperm.xlu0 %327, %v302
    %v329 = vpop.permute.xlu0 %328
    %332 = vset.pattern.permute.xlu0 0
    %333 = vperm.xlu0 %332, %v303
    %v334 = vpop.permute.xlu0 %333
    %337 = vset.pattern.permute.xlu0 0
    %338 = vperm.xlu0 %337, %v304
    %v339 = vpop.permute.xlu0 %338
    %342 = vset.pattern.permute.xlu0 0
    %343 = vperm.xlu0 %342, %v305
    %v344 = vpop.permute.xlu0 %343
    %vm346 = vcmask 785408
    %v348 = vsel %vm346, %v290, 0
    %v351 = vsel %vm346, %v291, 0
    %v354 = vsel %vm346, %v292, 0
    %v357 = vsel %vm346, %v293, 0
    %v360 = vsel %vm346, %v294, 0
    %v363 = vsel %vm346, %v295, 0
    %v366 = vsel %vm346, %v296, 0
    %v369 = vsel %vm346, %v297, 0
    %371 = vmatprep.subr.mxu0 0.0
    %372 = vmatpush1.msra.mxu0 0.0
    %373 = vmatprep.subr.mxu0 0.0
    %374 = vmatpush1.msra.mxu0 0.0
    %375 = vmatprep.subr.mxu0 0.0
    %376 = vmatpush1.msra.mxu0 0.0
    %377 = vmatprep.subr.mxu0 0.0
    %378 = vmatpush1.msra.mxu0 0.0
    %379 = vmatprep.subr.mxu0 0.0
    %380 = vmatpush1.msra.mxu0 %v287
    %381 = vmatprep.subr.mxu0 0.0
    %382 = vmatpush1.msra.mxu0 %v282
    %383 = vmatprep.subr.mxu0 0.0
    %384 = vmatpush1.msra.mxu0 %v277
    %385 = vmatprep.subr.mxu0 0.0
    %386 = vmatpush1.msra.mxu0 %v272
    %387 = vmatprep.subr.mxu0 0.0
    %388 = vmatpush1.msra.mxu0 %v51
    %389 = vmatprep.subr.mxu0 0.0
    %390 = vmatpush1.msra.mxu0 %v50
    %391 = vmatprep.subr.mxu0 0.0
    %392 = vmatpush1.msra.mxu0 %v49
    %393 = vmatprep.subr.mxu0 0.0
    %394 = vmatpush1.msra.mxu0 %v48
    %395 = vmatprep.subr.mxu0 0.0
    %396 = vmatpush1.msra.mxu0 %v202
    %397 = vmatprep.subr.mxu0 0.0
    %398 = vmatpush1.msra.mxu0 %v197
    %399 = vmatprep.subr.mxu0 0.0
    %400 = vmatpush1.msra.mxu0 %v192
    %401 = vmatprep.subr.mxu0 0.0
    %402 = vmatpush1.msra.mxu0 %v187
    %403 = vmatprep.subr.mxu0 0.0
    %404 = vmatpush2.msra.mxu0 0.0
    %405 = vmatprep.subr.mxu0 0.0
    %406 = vmatpush2.msra.mxu0 0.0
    %407 = vmatprep.subr.mxu0 0.0
    %408 = vmatpush2.msra.mxu0 0.0
    %409 = vmatprep.subr.mxu0 0.0
    %410 = vmatpush2.msra.mxu0 0.0
    %411 = vmatprep.subr.mxu0 0.0
    %412 = vmatpush2.msra.mxu0 0.0
    %413 = vmatprep.subr.mxu0 0.0
    %414 = vmatpush2.msra.mxu0 0.0
    %415 = vmatprep.subr.mxu0 0.0
    %416 = vmatpush2.msra.mxu0 0.0
    %417 = vmatprep.subr.mxu0 0.0
    %418 = vmatpush2.msra.mxu0 0.0
    %419 = vmatprep.subr.mxu0 0.0
    %420 = vmatpush2.msra.mxu0 0.0
    %421 = vmatprep.subr.mxu0 0.0
    %422 = vmatpush2.msra.mxu0 0.0
    %423 = vmatprep.subr.mxu0 0.0
    %424 = vmatpush2.msra.mxu0 0.0
    %425 = vmatprep.subr.mxu0 0.0
    %426 = vmatpush2.msra.mxu0 0.0
    %427 = vmatprep.subr.mxu0 0.0
    %428 = vmatpush2.msra.mxu0 0.0
    %429 = vmatprep.subr.mxu0 0.0
    %430 = vmatpush2.msra.mxu0 0.0
    %431 = vmatprep.subr.mxu0 0.0
    %432 = vmatpush2.msra.mxu0 0.0
    %433 = vmatprep.subr.mxu0 0.0
    %434 = vmatpush2.msra.mxu0 0.0
    %435 = vmatprep.mubr.f32.mxu0 0.0
    %436 = vmatmul.mubr.f32.gmra.mxu0 %v348
    %v437 = vpop.f32.mrf.mxu0
    %v438 = vadd.f32 %v309, %v437
    %v439 = vpop.f32.mrf.mxu0
    %440 = vmatprep.mubr.f32.mxu0 0.0
    %441 = vmatmul.mubr.f32.gmra.mxu0 %v351
    %v442 = vpop.f32.mrf.mxu0
    %v443 = vadd.f32 %v314, %v442
    %v444 = vpop.f32.mrf.mxu0
    %445 = vmatprep.mubr.f32.mxu0 0.0
    %446 = vmatmul.mubr.f32.gmra.mxu0 %v354
    %v447 = vpop.f32.mrf.mxu0
    %v448 = vadd.f32 %v319, %v447
    %v449 = vpop.f32.mrf.mxu0
    %450 = vmatprep.mubr.f32.mxu0 0.0
    %451 = vmatmul.mubr.f32.gmra.mxu0 %v357
    %v452 = vpop.f32.mrf.mxu0
    %v453 = vadd.f32 %v324, %v452
    %v454 = vpop.f32.mrf.mxu0
    %455 = vmatprep.mubr.f32.mxu0 0.0
    %456 = vmatmul.mubr.f32.gmra.mxu0 %v360
    %v457 = vpop.f32.mrf.mxu0
    %v458 = vadd.f32 %v329, %v457
    %v459 = vpop.f32.mrf.mxu0
    %460 = vmatprep.mubr.f32.mxu0 0.0
    %461 = vmatmul.mubr.f32.gmra.mxu0 %v363
    %v462 = vpop.f32.mrf.mxu0
    %v463 = vadd.f32 %v334, %v462
    %v464 = vpop.f32.mrf.mxu0
    %465 = vmatprep.mubr.f32.mxu0 0.0
    %466 = vmatmul.mubr.f32.gmra.mxu0 %v366
    %v467 = vpop.f32.mrf.mxu0
    %v468 = vadd.f32 %v339, %v467
    %v469 = vpop.f32.mrf.mxu0
    %470 = vmatprep.mubr.f32.mxu0 0.0
    %471 = vmatmul.mubr.f32.gmra.mxu0 %v369
    %v472 = vpop.f32.mrf.mxu0
    %v473 = vadd.f32 %v344, %v472
    %v474 = vpop.f32.mrf.mxu0
    %475 = vdwg.mxu0
    %vm476 = vcmp.gt.f32.partialorder %v438, 0.0
    %vm477 = vcmp.gt.f32.partialorder %v443, 0.0
    %vm478 = vcmp.gt.f32.partialorder %v448, 0.0
    %vm479 = vcmp.gt.f32.partialorder %v453, 0.0
    %vm480 = vcmp.gt.f32.partialorder %v458, 0.0
    %vm481 = vcmp.gt.f32.partialorder %v463, 0.0
    %vm482 = vcmp.gt.f32.partialorder %v468, 0.0
    %vm483 = vcmp.gt.f32.partialorder %v473, 0.0
    %v484 = vmul.f32 %v438, 0.1
    %v485 = vmul.f32 %v443, 0.1
    %v486 = vmul.f32 %v448, 0.1
    %v487 = vmul.f32 %v453, 0.1
    %v488 = vmul.f32 %v458, 0.1
    %v489 = vmul.f32 %v463, 0.1
    %v490 = vmul.f32 %v468, 0.1
    %v491 = vmul.f32 %v473, 0.1
    %v492 = vsel %vm476, %v438, %v484
    %v493 = vsel %vm477, %v443, %v485
    %v494 = vsel %vm478, %v448, %v486
    %v495 = vsel %vm479, %v453, %v487
    %v496 = vsel %vm480, %v458, %v488
    %v497 = vsel %vm481, %v463, %v489
    %v498 = vsel %vm482, %v468, %v490
    %v499 = vsel %vm483, %v473, %v491
    %v501 = vsel %vm107, %v492, 0
    %v504 = vsel %vm107, %v493, 0
    %v507 = vsel %vm107, %v494, 0
    %v510 = vsel %vm107, %v495, 0
    %v513 = vsel %vm107, %v496, 0
    %v516 = vsel %vm107, %v497, 0
    %v519 = vsel %vm107, %v498, 0
    %v522 = vsel %vm107, %v499, 0
    %524 = vmatprep.subr.mxu0 0.0
    %525 = vmatpush1.msra.mxu0 0.0
    %526 = vmatprep.subr.mxu0 0.0
    %527 = vmatpush1.msra.mxu0 0.0
    %528 = vmatprep.subr.mxu0 0.0
    %529 = vmatpush1.msra.mxu0 0.0
    %530 = vmatprep.subr.mxu0 0.0
    %531 = vmatpush1.msra.mxu0 0.0
    %532 = vmatprep.subr.mxu0 0.0
    %533 = vmatpush1.msra.mxu0 0.0
    %534 = vmatprep.subr.mxu0 0.0
    %535 = vmatpush1.msra.mxu0 0.0
    %536 = vmatprep.subr.mxu0 0.0
    %537 = vmatpush1.msra.mxu0 0.0
    %538 = vmatprep.subr.mxu0 0.0
    %539 = vmatpush1.msra.mxu0 0.0
    %540 = vmatprep.subr.mxu0 0.0
    %541 = vmatpush1.msra.mxu0 0.0
    %542 = vmatprep.subr.mxu0 0.0
    %543 = vmatpush1.msra.mxu0 0.0
    %544 = vmatprep.subr.mxu0 0.0
    %545 = vmatpush1.msra.mxu0 0.0
    %546 = vmatprep.subr.mxu0 0.0
    %547 = vmatpush1.msra.mxu0 0.0
    %548 = vmatprep.subr.mxu0 0.0
    %549 = vmatpush1.msra.mxu0 %v88
    %550 = vmatprep.subr.mxu0 0.0
    %551 = vmatpush1.msra.mxu0 %v87
    %552 = vmatprep.subr.mxu0 0.0
    %553 = vmatpush1.msra.mxu0 %v86
    %554 = vmatprep.subr.mxu0 0.0
    %555 = vmatpush1.msra.mxu0 %v85
    %556 = vmatprep.subr.mxu0 0.0
    %557 = vmatpush2.msra.mxu0 0.0
    %558 = vmatprep.subr.mxu0 0.0
    %559 = vmatpush2.msra.mxu0 0.0
    %560 = vmatprep.subr.mxu0 0.0
    %561 = vmatpush2.msra.mxu0 0.0
    %562 = vmatprep.subr.mxu0 0.0
    %563 = vmatpush2.msra.mxu0 0.0
    %564 = vmatprep.subr.mxu0 0.0
    %565 = vmatpush2.msra.mxu0 0.0
    %566 = vmatprep.subr.mxu0 0.0
    %567 = vmatpush2.msra.mxu0 0.0
    %568 = vmatprep.subr.mxu0 0.0
    %569 = vmatpush2.msra.mxu0 0.0
    %570 = vmatprep.subr.mxu0 0.0
    %571 = vmatpush2.msra.mxu0 0.0
    %572 = vmatprep.subr.mxu0 0.0
    %573 = vmatpush2.msra.mxu0 0.0
    %574 = vmatprep.subr.mxu0 0.0
    %575 = vmatpush2.msra.mxu0 0.0
    %576 = vmatprep.subr.mxu0 0.0
    %577 = vmatpush2.msra.mxu0 0.0
    %578 = vmatprep.subr.mxu0 0.0
    %579 = vmatpush2.msra.mxu0 0.0
    %580 = vmatprep.subr.mxu0 0.0
    %581 = vmatpush2.msra.mxu0 0.0
    %582 = vmatprep.subr.mxu0 0.0
    %583 = vmatpush2.msra.mxu0 0.0
    %584 = vmatprep.subr.mxu0 0.0
    %585 = vmatpush2.msra.mxu0 0.0
    %586 = vmatprep.subr.mxu0 0.0
    %587 = vmatpush2.msra.mxu0 0.0
    %588 = vmatprep.mubr.f32.mxu0 0.0
    %589 = vmatmul.mubr.f32.gmra.mxu0 %v501
    %v590 = vpop.f32.mrf.mxu0
    %v591 = vadd.f32 0.0, %v590
    %v592 = vpop.f32.mrf.mxu0
    %593 = vmatprep.mubr.f32.mxu0 0.0
    %594 = vmatmul.mubr.f32.gmra.mxu0 %v504
    %v595 = vpop.f32.mrf.mxu0
    %v596 = vadd.f32 0.0, %v595
    %v597 = vpop.f32.mrf.mxu0
    %598 = vmatprep.mubr.f32.mxu0 0.0
    %599 = vmatmul.mubr.f32.gmra.mxu0 %v507
    %v600 = vpop.f32.mrf.mxu0
    %v601 = vadd.f32 0.0, %v600
    %v602 = vpop.f32.mrf.mxu0
    %603 = vmatprep.mubr.f32.mxu0 0.0
    %604 = vmatmul.mubr.f32.gmra.mxu0 %v510
    %v605 = vpop.f32.mrf.mxu0
    %v606 = vadd.f32 0.0, %v605
    %v607 = vpop.f32.mrf.mxu0
    %608 = vmatprep.mubr.f32.mxu0 0.0
    %609 = vmatmul.mubr.f32.gmra.mxu0 %v513
    %v610 = vpop.f32.mrf.mxu0
    %v611 = vadd.f32 0.0, %v610
    %v612 = vpop.f32.mrf.mxu0
    %613 = vmatprep.mubr.f32.mxu0 0.0
    %614 = vmatmul.mubr.f32.gmra.mxu0 %v516
    %v615 = vpop.f32.mrf.mxu0
    %v616 = vadd.f32 0.0, %v615
    %v617 = vpop.f32.mrf.mxu0
    %618 = vmatprep.mubr.f32.mxu0 0.0
    %619 = vmatmul.mubr.f32.gmra.mxu0 %v519
    %v620 = vpop.f32.mrf.mxu0
    %v621 = vadd.f32 0.0, %v620
    %v622 = vpop.f32.mrf.mxu0
    %623 = vmatprep.mubr.f32.mxu0 0.0
    %624 = vmatmul.mubr.f32.gmra.mxu0 %v522
    %v625 = vpop.f32.mrf.mxu0
    %v626 = vadd.f32 0.0, %v625
    %v627 = vpop.f32.mrf.mxu0
    %628 = vdwg.mxu0
    %629 = vmatprep.subr.mxu0 0.0
    %630 = vmatpush1.msra.mxu0 0.0
    %631 = vmatprep.subr.mxu0 0.0
    %632 = vmatpush1.msra.mxu0 0.0
    %633 = vmatprep.subr.mxu0 0.0
    %634 = vmatpush1.msra.mxu0 0.0
    %635 = vmatprep.subr.mxu0 0.0
    %636 = vmatpush1.msra.mxu0 0.0
    %637 = vmatprep.subr.mxu0 0.0
    %638 = vmatpush1.msra.mxu0 0.0
    %639 = vmatprep.subr.mxu0 0.0
    %640 = vmatpush1.msra.mxu0 0.0
    %641 = vmatprep.subr.mxu0 0.0
    %642 = vmatpush1.msra.mxu0 0.0
    %643 = vmatprep.subr.mxu0 0.0
    %644 = vmatpush1.msra.mxu0 0.0
    %645 = vmatprep.subr.mxu0 0.0
    %646 = vmatpush1.msra.mxu0 0.0
    %647 = vmatprep.subr.mxu0 0.0
    %648 = vmatpush1.msra.mxu0 0.0
    %649 = vmatprep.subr.mxu0 0.0
    %650 = vmatpush1.msra.mxu0 0.0
    %651 = vmatprep.subr.mxu0 0.0
    %652 = vmatpush1.msra.mxu0 0.0
    %653 = vmatprep.subr.mxu0 0.0
    %654 = vmatpush1.msra.mxu0 %v106
    %655 = vmatprep.subr.mxu0 0.0
    %656 = vmatpush1.msra.mxu0 %v105
    %657 = vmatprep.subr.mxu0 0.0
    %658 = vmatpush1.msra.mxu0 %v104
    %659 = vmatprep.subr.mxu0 0.0
    %660 = vmatpush1.msra.mxu0 %v103
    %661 = vmatprep.subr.mxu0 0.0
    %662 = vmatpush2.msra.mxu0 0.0
    %663 = vmatprep.subr.mxu0 0.0
    %664 = vmatpush2.msra.mxu0 0.0
    %665 = vmatprep.subr.mxu0 0.0
    %666 = vmatpush2.msra.mxu0 0.0
    %667 = vmatprep.subr.mxu0 0.0
    %668 = vmatpush2.msra.mxu0 0.0
    %669 = vmatprep.subr.mxu0 0.0
    %670 = vmatpush2.msra.mxu0 0.0
    %671 = vmatprep.subr.mxu0 0.0
    %672 = vmatpush2.msra.mxu0 0.0
    %673 = vmatprep.subr.mxu0 0.0
    %674 = vmatpush2.msra.mxu0 0.0
    %675 = vmatprep.subr.mxu0 0.0
    %676 = vmatpush2.msra.mxu0 0.0
    %677 = vmatprep.subr.mxu0 0.0
    %678 = vmatpush2.msra.mxu0 0.0
    %679 = vmatprep.subr.mxu0 0.0
    %680 = vmatpush2.msra.mxu0 0.0
    %681 = vmatprep.subr.mxu0 0.0
    %682 = vmatpush2.msra.mxu0 0.0
    %683 = vmatprep.subr.mxu0 0.0
    %684 = vmatpush2.msra.mxu0 0.0
    %685 = vmatprep.subr.mxu0 0.0
    %686 = vmatpush2.msra.mxu0 0.0
    %687 = vmatprep.subr.mxu0 0.0
    %688 = vmatpush2.msra.mxu0 0.0
    %689 = vmatprep.subr.mxu0 0.0
    %690 = vmatpush2.msra.mxu0 0.0
    %691 = vmatprep.subr.mxu0 0.0
    %692 = vmatpush2.msra.mxu0 0.0
    %693 = vmatprep.mubr.f32.mxu0 0.0
    %694 = vmatmul.mubr.f32.gmra.mxu0 %v501
    %v695 = vpop.f32.mrf.mxu0
    %v696 = vadd.f32 0.0, %v695
    %v697 = vpop.f32.mrf.mxu0
    %698 = vmatprep.mubr.f32.mxu0 0.0
    %699 = vmatmul.mubr.f32.gmra.mxu0 %v504
    %v700 = vpop.f32.mrf.mxu0
    %v701 = vadd.f32 0.0, %v700
    %v702 = vpop.f32.mrf.mxu0
    %703 = vmatprep.mubr.f32.mxu0 0.0
    %704 = vmatmul.mubr.f32.gmra.mxu0 %v507
    %v705 = vpop.f32.mrf.mxu0
    %v706 = vadd.f32 0.0, %v705
    %v707 = vpop.f32.mrf.mxu0
    %708 = vmatprep.mubr.f32.mxu0 0.0
    %709 = vmatmul.mubr.f32.gmra.mxu0 %v510
    %v710 = vpop.f32.mrf.mxu0
    %v711 = vadd.f32 0.0, %v710
    %v712 = vpop.f32.mrf.mxu0
    %713 = vmatprep.mubr.f32.mxu0 0.0
    %714 = vmatmul.mubr.f32.gmra.mxu0 %v513
    %v715 = vpop.f32.mrf.mxu0
    %v716 = vadd.f32 0.0, %v715
    %v717 = vpop.f32.mrf.mxu0
    %718 = vmatprep.mubr.f32.mxu0 0.0
    %719 = vmatmul.mubr.f32.gmra.mxu0 %v516
    %v720 = vpop.f32.mrf.mxu0
    %v721 = vadd.f32 0.0, %v720
    %v722 = vpop.f32.mrf.mxu0
    %723 = vmatprep.mubr.f32.mxu0 0.0
    %724 = vmatmul.mubr.f32.gmra.mxu0 %v519
    %v725 = vpop.f32.mrf.mxu0
    %v726 = vadd.f32 0.0, %v725
    %v727 = vpop.f32.mrf.mxu0
    %728 = vmatprep.mubr.f32.mxu0 0.0
    %729 = vmatmul.mubr.f32.gmra.mxu0 %v522
    %v730 = vpop.f32.mrf.mxu0
    %v731 = vadd.f32 0.0, %v730
    %v732 = vpop.f32.mrf.mxu0
    %733 = vdwg.mxu0
    %v734 = vld [vmem:[%s3] sm:$0xff]
    %v735 = vld [vmem:[%s3 + $0x8] sm:$0xff]
    %v736 = vld [vmem:[%s3 + $0x10] sm:$0xff]
    %v737 = vld [vmem:[%s3 + $0x18] sm:$0xff]
    %v738 = vld [vmem:[%s3 + $0x20] sm:$0xff]
    %v739 = vld [vmem:[%s3 + $0x28] sm:$0xff]
    %v740 = vld [vmem:[%s3 + $0x30] sm:$0xff]
    %v741 = vld [vmem:[%s3 + $0x38] sm:$0xff]
    %743 = vset.pattern.permute.xlu0 0
    %744 = vperm.xlu0 %743, %v734
    %v745 = vpop.permute.xlu0 %744
    %748 = vset.pattern.permute.xlu0 0
    %749 = vperm.xlu0 %748, %v735
    %v750 = vpop.permute.xlu0 %749
    %753 = vset.pattern.permute.xlu0 0
    %754 = vperm.xlu0 %753, %v736
    %v755 = vpop.permute.xlu0 %754
    %758 = vset.pattern.permute.xlu0 0
    %759 = vperm.xlu0 %758, %v737
    %v760 = vpop.permute.xlu0 %759
    %763 = vset.pattern.permute.xlu0 0
    %764 = vperm.xlu0 %763, %v738
    %v765 = vpop.permute.xlu0 %764
    %768 = vset.pattern.permute.xlu0 0
    %769 = vperm.xlu0 %768, %v739
    %v770 = vpop.permute.xlu0 %769
    %773 = vset.pattern.permute.xlu0 0
    %774 = vperm.xlu0 %773, %v740
    %v775 = vpop.permute.xlu0 %774
    %778 = vset.pattern.permute.xlu0 0
    %779 = vperm.xlu0 %778, %v741
    %v780 = vpop.permute.xlu0 %779
    %v782 = vmul.f32 %v591, %v745
    %v783 = vmul.f32 %v596, %v750
    %v784 = vmul.f32 %v601, %v755
    %v785 = vmul.f32 %v606, %v760
    %v786 = vmul.f32 %v611, %v765
    %v787 = vmul.f32 %v616, %v770
    %v788 = vmul.f32 %v621, %v775
    %v789 = vmul.f32 %v626, %v780
    %s790 = scalar_lea.vmem %s3, 64
    %v791 = vld [vmem:[%s790] sm:$0xff]
    %v792 = vld [vmem:[%s790 + $0x8] sm:$0xff]
    %v793 = vld [vmem:[%s790 + $0x10] sm:$0xff]
    %v794 = vld [vmem:[%s790 + $0x18] sm:$0xff]
    %v795 = vld [vmem:[%s790 + $0x20] sm:$0xff]
    %v796 = vld [vmem:[%s790 + $0x28] sm:$0xff]
    %v797 = vld [vmem:[%s790 + $0x30] sm:$0xff]
    %v798 = vld [vmem:[%s790 + $0x38] sm:$0xff]
    %800 = vset.pattern.permute.xlu0 0
    %801 = vperm.xlu0 %800, %v791
    %v802 = vpop.permute.xlu0 %801
    %805 = vset.pattern.permute.xlu0 0
    %806 = vperm.xlu0 %805, %v792
    %v807 = vpop.permute.xlu0 %806
    %810 = vset.pattern.permute.xlu0 0
    %811 = vperm.xlu0 %810, %v793
    %v812 = vpop.permute.xlu0 %811
    %815 = vset.pattern.permute.xlu0 0
    %816 = vperm.xlu0 %815, %v794
    %v817 = vpop.permute.xlu0 %816
    %820 = vset.pattern.permute.xlu0 0
    %821 = vperm.xlu0 %820, %v795
    %v822 = vpop.permute.xlu0 %821
    %825 = vset.pattern.permute.xlu0 0
    %826 = vperm.xlu0 %825, %v796
    %v827 = vpop.permute.xlu0 %826
    %830 = vset.pattern.permute.xlu0 0
    %831 = vperm.xlu0 %830, %v797
    %v832 = vpop.permute.xlu0 %831
    %835 = vset.pattern.permute.xlu0 0
    %836 = vperm.xlu0 %835, %v798
    %v837 = vpop.permute.xlu0 %836
    %v839 = vmul.f32 %v492, %v802
    %v840 = vmul.f32 %v493, %v807
    %v841 = vmul.f32 %v494, %v812
    %v842 = vmul.f32 %v495, %v817
    %v843 = vmul.f32 %v496, %v822
    %v844 = vmul.f32 %v497, %v827
    %v845 = vmul.f32 %v498, %v832
    %v846 = vmul.f32 %v499, %v837
    %v847 = vadd.f32 %v782, %v839
    %v848 = vadd.f32 %v783, %v840
    %v849 = vadd.f32 %v784, %v841
    %v850 = vadd.f32 %v785, %v842
    %v851 = vadd.f32 %v786, %v843
    %v852 = vadd.f32 %v787, %v844
    %v853 = vadd.f32 %v788, %v845
    %v854 = vadd.f32 %v789, %v846
    %s855 = scalar_lea.vmem %s3, 128
    %v856 = vld [vmem:[%s855] sm:$0xff]
    %v857 = vld [vmem:[%s855 + $0x8] sm:$0xff]
    %v858 = vld [vmem:[%s855 + $0x10] sm:$0xff]
    %v859 = vld [vmem:[%s855 + $0x18] sm:$0xff]
    %v860 = vld [vmem:[%s855 + $0x20] sm:$0xff]
    %v861 = vld [vmem:[%s855 + $0x28] sm:$0xff]
    %v862 = vld [vmem:[%s855 + $0x30] sm:$0xff]
    %v863 = vld [vmem:[%s855 + $0x38] sm:$0xff]
    %865 = vset.pattern.permute.xlu0 0
    %866 = vperm.xlu0 %865, %v856
    %v867 = vpop.permute.xlu0 %866
    %870 = vset.pattern.permute.xlu0 0
    %871 = vperm.xlu0 %870, %v857
    %v872 = vpop.permute.xlu0 %871
    %875 = vset.pattern.permute.xlu0 0
    %876 = vperm.xlu0 %875, %v858
    %v877 = vpop.permute.xlu0 %876
    %880 = vset.pattern.permute.xlu0 0
    %881 = vperm.xlu0 %880, %v859
    %v882 = vpop.permute.xlu0 %881
    %885 = vset.pattern.permute.xlu0 0
    %886 = vperm.xlu0 %885, %v860
    %v887 = vpop.permute.xlu0 %886
    %890 = vset.pattern.permute.xlu0 0
    %891 = vperm.xlu0 %890, %v861
    %v892 = vpop.permute.xlu0 %891
    %895 = vset.pattern.permute.xlu0 0
    %896 = vperm.xlu0 %895, %v862
    %v897 = vpop.permute.xlu0 %896
    %900 = vset.pattern.permute.xlu0 0
    %901 = vperm.xlu0 %900, %v863
    %v902 = vpop.permute.xlu0 %901
    %v904 = vmul.f32 %v696, %v867
    %v905 = vmul.f32 %v701, %v872
    %v906 = vmul.f32 %v706, %v877
    %v907 = vmul.f32 %v711, %v882
    %v908 = vmul.f32 %v716, %v887
    %v909 = vmul.f32 %v721, %v892
    %v910 = vmul.f32 %v726, %v897
    %v911 = vmul.f32 %v731, %v902
    %v912 = vadd.f32 %v847, %v904
    %v913 = vadd.f32 %v848, %v905
    %v914 = vadd.f32 %v849, %v906
    %v915 = vadd.f32 %v850, %v907
    %v916 = vadd.f32 %v851, %v908
    %v917 = vadd.f32 %v852, %v909
    %v918 = vadd.f32 %v853, %v910
    %v919 = vadd.f32 %v854, %v911
    %v920 = vsel %vm107, %v912, 0.0
    %v921 = vsel %vm107, %v913, 0.0
    %v922 = vadd.f32 %v920, %v921
    %v923 = vsel %vm107, %v914, 0.0
    %v924 = vadd.f32 %v922, %v923
    %v925 = vsel %vm107, %v915, 0.0
    %v926 = vadd.f32 %v924, %v925
    %v927 = vsel %vm107, %v916, 0.0
    %v928 = vadd.f32 %v926, %v927
    %v929 = vsel %vm107, %v917, 0.0
    %v930 = vadd.f32 %v928, %v929
    %v931 = vsel %vm107, %v918, 0.0
    %v932 = vadd.f32 %v930, %v931
    %v933 = vsel %vm107, %v919, 0.0
    %v934 = vadd.f32 %v932, %v933
    %v935 = vrot.slane %v934, 4
    %v936 = vadd.f32 %v934, %v935
    %v937 = vrot.slane %v936, 2
    %v938 = vadd.f32 %v936, %v937
    %v939 = vrot.slane %v938, 1
    %v940 = vadd.f32 %v938, %v939
    %s941 = sld [smem:[#allocation2]]
    %v942 = vstv %s941
    %v943 = vadd.f32 %v940, %v942
    %v944 = vtanh.pop %v943
    %vm945 = vcmask 122880
    %946 = vst.msk [vmem:[#allocation3] sm:$0x1] %vm945, %v944
    %948 = vrot.lane.b32.xlu0 %v944, 112
    %v949 = vpop.permute.xlu0 %948
    %s951 = scalar_lea.vmem [#allocation3], 1
    %952 = vst.msk [vmem:[%s951] sm:$0x1] %vm945, %v949
    // Predicated region
    $region22: #{vocoder_forward.1} parent=1 // pred_check
      _
    $region23: #{vocoder_forward.1} parent=1 // pred_check_branch
      %954 = sbr.rel (0) target = $region25
    $region24: #{vocoder_forward.1} parent=1 // pred_region
      %s956 = ssub.s32 32, 32
      %957 = vsyncadd [#allocation4], %s956
      %s958 = sshll.u32 [#allocation3], 4
      %s959 = int_to_ptr.vmem [resolvable:$true] %s958
      %964 = dma.vmem_to_hbm [thread:$0]  %s959, 32, %s5, [#allocation4], 16, 16, 1
    $region25: #{vocoder_forward.1} parent=1 // pred_fallthru
      _
    // Predicated region
    $region26: #{vocoder_forward.1} parent=1 // pred_check
      _
    $region27: #{vocoder_forward.1} parent=1 // pred_check_branch
      %966 = sbr.rel (0) target = $region29
    $region28: #{vocoder_forward.1} parent=1 // pred_region
      %967 = dma.done [#allocation4], 32
    $region29: #{vocoder_forward.1} parent=1 // pred_fallthru
      _
    %968 = vsyncpa [#allocation4], 1

</llo_original>
